<compile_context>
chip_gen: v7x
topology: tpu7x:2x2x1
jax: 0.10.0
libtpu: 0.0.40
codegen_flags: <defaults>
</compile_context>

<pallas_src>
import numpy as np
import jax
import jax.numpy as jnp
from jax.experimental import pallas as pl
from jax.experimental.pallas import tpu as pltpu


def _round_up(v, m):
    return ((v + m - 1) // m) * m


def _tpu_budget():
    """Return (vmem_limit_bytes, num_tensorcores) with conservative fallbacks."""
    vmem_cap = None
    num_tc = 1
    try:
        info = pltpu.get_tpu_info()
        vmem_cap = getattr(info, "vmem_capacity_bytes", None)
        cores = getattr(info, "num_cores", None) or getattr(info, "core_count", None)
        if cores:
            num_tc = int(cores)
    except Exception:
        pass
    if vmem_cap is None:
        vmem_cap = 64 * 1024 * 1024          # assume the smallest (v7x per-TC) cap
    if vmem_cap <= 64 * 1024 * 1024:
        vmem_limit = 40 * 1024 * 1024        # v7x: leave headroom under 64 MiB
    else:
        vmem_limit = 56 * 1024 * 1024        # v5e / v6e: 128 MiB physical
    return vmem_limit, num_tc


# ----------------------------------------------------------------------------
# Pallas kernels
# ----------------------------------------------------------------------------
def _matmul_kernel_nored(x_ref, w_ref, o_ref):
    # Single K tile: no reduction axis, no scratch, direct MXU dot -> store.
    o_ref[...] = jnp.dot(
        x_ref[...], w_ref[...], preferred_element_type=jnp.float32
    ).astype(o_ref.dtype)


def _matmul_kernel_red_f32out(x_ref, w_ref, o_ref):
    # f32 output block index is constant across k -> it is resident; accumulate
    # directly into it (no separate VMEM acc scratch).
    @pl.when(pl.program_id(2) == 0)
    def _():
        o_ref[...] = jnp.zeros_like(o_ref)

    o_ref[...] += jnp.dot(x_ref[...], w_ref[...], preferred_element_type=jnp.float32)


def _matmul_kernel_red_acc(x_ref, w_ref, o_ref, acc_ref):
    # Non-f32 output: keep an f32 accumulator, cast once at the end.
    @pl.when(pl.program_id(2) == 0)
    def _():
        acc_ref[...] = jnp.zeros_like(acc_ref)

    acc_ref[...] += jnp.dot(x_ref[...], w_ref[...], preferred_element_type=jnp.float32)

    @pl.when(pl.program_id(2) == pl.num_programs(2) - 1)
    def _():
        o_ref[...] = acc_ref[...].astype(o_ref.dtype)


# ----------------------------------------------------------------------------
# Wrapper: x (M, K) @ w (K, N) -> (M, N).  N must be a multiple of 128.
# M is padded internally to the row tile; K is assumed padded/tileable by caller.
# ----------------------------------------------------------------------------
def pallas_matmul(x, w, *, out_dtype=jnp.float32, tm=None, tn=None, tk=None):
    M, K = x.shape
    K2, N = w.shape
    assert K == K2
    assert N % 128 == 0, "pad the weight's column dim to a multiple of 128"

    x_itemsize = jnp.dtype(x.dtype).itemsize
    w_itemsize = jnp.dtype(w.dtype).itemsize
    out_itemsize = jnp.dtype(out_dtype).itemsize
    vmem_limit, num_tc = _tpu_budget()

    # --- Row (M) tile: pad the batch so tm always divides; up to 512 rows,
    # 256 when >1 TensorCore so the parallel M axis has >= 2 steps (v7x).
    if tm is None:
        if M <= 512:
            tm = _round_up(M, 8)
        else:
            tm = 512
            if num_tc > 1:
                tm = 256
    M_pad = _round_up(M, tm)

    # --- Column (N) tile: keep the whole frozen weight panel resident in VMEM
    # when it fits the budget, else lane-dense 256/128-wide tiles.
    if tn is None:
        if K * N * w_itemsize <= 8 * 1024 * 1024:
            tn = N
        elif N % 256 == 0:
            tn = 256
        else:
            tn = 128            # N is always a multiple of 128
    assert N % tn == 0

    # --- Contraction (K) tile: keep the full K resident unless K is large.
    if tk is None:
        if K <= 2048:
            tk = K
        elif K % 512 == 0:
            tk = 512
        elif K % 256 == 0:
            tk = 256
        elif K % 128 == 0:
            tk = 128
        else:
            tk = K   # TODO(synk): zero-pad K instead of a full-K panel for odd large K.
    assert K % tk == 0
    kt = K // tk

    if M_pad != M:
        x = jnp.pad(x, ((0, M_pad - M), (0, 0)))

    cost = pl.CostEstimate(
        flops=2 * M_pad * K * N,
        transcendentals=0,
        bytes_accessed=M_pad * K * x_itemsize
        + K * N * w_itemsize
        + M_pad * N * out_itemsize,
    )

    def cparams(sem):
        return pltpu.CompilerParams(
            dimension_semantics=sem, vmem_limit_bytes=vmem_limit
        )

    if kt == 1:
        grid_m = M_pad // tm
        if tn == N:
            # Whole weight panel resident; its block index never changes along
            # the grid.  For large panels drop the pointless double buffer.
            w_kwargs = {}
            if K * N * w_itemsize >= (2 << 20):
                w_kwargs["pipeline_mode"] = pl.Buffered(1)
            w_spec = pl.BlockSpec((K, N), lambda i: (0, 0), **w_kwargs)
            out = pl.pallas_call(
                _matmul_kernel_nored,
                out_shape=jax.ShapeDtypeStruct((M_pad, N), out_dtype),
                grid_spec=pltpu.PrefetchScalarGridSpec(
                    num_scalar_prefetch=0,
                    grid=(grid_m,),
                    in_specs=[
                        pl.BlockSpec((tm, K), lambda i: (i, 0)),
                        w_spec,
                    ],
                    out_specs=pl.BlockSpec((tm, N), lambda i: (i, 0)),
                ),
                compiler_params=cparams(("parallel",)),
                cost_estimate=cost,
            )(x, w)
        else:
            # Multiple N tiles: put the M axis innermost so the weight tile's
            # block index is constant along the inner axis (DMA'd once per j,
            # not re-read M/tm times).
            out = pl.pallas_call(
                _matmul_kernel_nored,
                out_shape=jax.ShapeDtypeStruct((M_pad, N), out_dtype),
                grid_spec=pltpu.PrefetchScalarGridSpec(
                    num_scalar_prefetch=0,
                    grid=(N // tn, grid_m),
                    in_specs=[
                        pl.BlockSpec((tm, K), lambda j, i: (i, 0)),
                        pl.BlockSpec((K, tn), lambda j, i: (0, j)),
                    ],
                    out_specs=pl.BlockSpec((tm, tn), lambda j, i: (i, j)),
                ),
                compiler_params=cparams(("parallel", "parallel")),
                cost_estimate=cost,
            )(x, w)
        return out[:M] if M_pad != M else out

    # 3-D grid with K reduction (k innermost).
    if jnp.dtype(out_dtype) == jnp.dtype(jnp.float32):
        kernel, scratch = _matmul_kernel_red_f32out, []
    else:
        kernel, scratch = _matmul_kernel_red_acc, [pltpu.VMEM((tm, tn), jnp.float32)]

    out = pl.pallas_call(
        kernel,
        out_shape=jax.ShapeDtypeStruct((M_pad, N), out_dtype),
        grid_spec=pltpu.PrefetchScalarGridSpec(
            num_scalar_prefetch=0,
            grid=(M_pad // tm, N // tn, kt),
            in_specs=[
                pl.BlockSpec((tm, tk), lambda i, j, k: (i, k)),
                pl.BlockSpec((tk, tn), lambda i, j, k: (k, j)),
            ],
            out_specs=pl.BlockSpec((tm, tn), lambda i, j, k: (i, j)),
            scratch_shapes=scratch,
        ),
        compiler_params=cparams(("parallel", "parallel", "arbitrary")),
        cost_estimate=cost,
    )(x, w)
    return out[:M] if M_pad != M else out


# ----------------------------------------------------------------------------
# nonETF_Classifier: parameter construction (plain numpy glue) + forward
# ----------------------------------------------------------------------------
class NonETFClassifier:
    """JAX/Pallas port of nonETF_Classifier.

    ori_M = (P @ sqrt_matrix)[:, num_classes:] where P is a random
    (feat_in, 2*num_classes) orthonormal matrix and sqrt_matrix is the
    deterministic matrix square root of the simplex-ETF generator.
    forward(x) = x @ ori_M   (matmul runs on the MXU inside a Pallas kernel).
    """

    def __init__(self, feat_in, num_classes, seed=0, compute_dtype=jnp.bfloat16):
        self.feat_in = feat_in
        self.num_classes = num_classes
        self.compute_dtype = compute_dtype
        twoK = 2 * num_classes

        # deterministic random orthogonal matrix P: (feat_in, 2*num_classes)
        rng = np.random.RandomState(seed)
        a = rng.random_sample(size=(feat_in, twoK))
        P, _ = np.linalg.qr(a)
        assert np.allclose(P.T @ P, np.eye(twoK), atol=1e-6)
        P = P.astype(np.float32)

        # deterministic `sqrt_matrix` (module-level global in the original code):
        # matrix square root of scale * (I - ones/(2K)), via eigendecomposition.
        scale = np.sqrt(twoK / (twoK - 1.0))
        G = scale * (np.eye(twoK) - np.ones((twoK, twoK)) / twoK)
        evals, evecs = np.linalg.eigh(G)
        sqrt_matrix = (evecs * np.sqrt(np.clip(evals, 0.0, None))) @ evecs.T
        sqrt_matrix = sqrt_matrix.astype(np.float32)

        PM = P @ sqrt_matrix                      # (feat_in, 2*num_classes)
        M = PM[:, num_classes:]                   # (feat_in, num_classes)
        self.ori_M = jnp.asarray(M, dtype=jnp.float32)   # frozen f32 reference param

        # Lane-dense padded copy for the kernel, stored in bf16: zero-pad columns
        # to a multiple of 128 (unmasked full-lane stores) and halve the bytes
        # moved on this HBM-bound matmul.  Accumulation stays f32 in the kernel.
        self._n_pad = _round_up(num_classes, 128)
        M_pad = np.zeros((feat_in, self._n_pad), dtype=np.float32)
        M_pad[:, :num_classes] = M
        self.ori_M_padded = jnp.asarray(M_pad).astype(compute_dtype)

    def __call__(self, x, *, force_pallas=False, return_padded=False):
        B, K = x.shape
        assert K == self.feat_in
        # For tiny workloads the pallas_call fixed overhead dominates the
        # ~KFLOP matmul; fall back to plain jnp.dot (or fuse upstream) there.
        if not force_pallas and (B * K * self.num_classes) < (1 << 18):
            return x @ self.ori_M
        out = pallas_matmul(
            x.astype(self.compute_dtype), self.ori_M_padded, out_dtype=jnp.float32
        )
        if return_padded:
            # Padded columns are exact zeros; masking in the loss avoids the
            # extra HBM->HBM copy of the column slice below.
            return out
        return out[:, : self.num_classes]


# ----------------------------------------------------------------------------
if __name__ == "__main__":
    batch, feat_in, num_classes = 8, 32, 16

    clf = NonETFClassifier(feat_in, num_classes, seed=0)

    key = jax.random.PRNGKey(0)
    x = jax.random.normal(key, (batch, feat_in), dtype=jnp.float32)

    # force_pallas=True to exercise the kernel even at these tiny demo shapes.
    out = clf(x, force_pallas=True)
    out = jax.block_until_ready(out)
    assert out.shape == (batch, num_classes)

    # Exact reference along the same bf16 datapath (f32 accumulation).
    ref_bf16 = jnp.dot(
        x.astype(jnp.bfloat16), clf.ori_M_padded, preferred_element_type=jnp.float32
    )[:, :num_classes]
    assert jnp.allclose(out, ref_bf16, atol=1e-4, rtol=1e-4), float(
        jnp.max(jnp.abs(out - ref_bf16))
    )

    # Module-level f32 reference (loose tolerance: bf16 weights/activations).
    ref_f32 = x @ clf.ori_M
    assert jnp.allclose(out, ref_f32, atol=5e-2, rtol=5e-2), float(
        jnp.max(jnp.abs(out - ref_f32))
    )

    print("KERNEL_OK")
</pallas_src>

<mosaic_0001>
module attributes {stable_mosaic.version = 11 : i64} {
  func.func @_matmul_kernel_nored(%arg0: i32, %arg1: memref<8x32xbf16, #tpu.memory_space<vmem>>, %arg2: memref<32x128xbf16, #tpu.memory_space<vmem>>, %arg3: memref<8x128xf32, #tpu.memory_space<vmem>>) attributes {dimension_semantics = [#tpu.dimension_semantics<parallel>], iteration_bounds = array<i64: 1>, scalar_prefetch = 0 : i64, scratch_operands = 0 : i64, tpu.core_type = #tpu.core_type<tc>, window_params = [{transform_indices = @transform_0, window_bounds = array<i64: 8, 32>}, {pipeline_mode = #tpu.pipeline_mode<synchronous>, transform_indices = @transform_1, window_bounds = array<i64: 32, 128>}, {transform_indices = @transform_2, window_bounds = array<i64: 8, 128>}]} {
    %c0 = arith.constant 0 : index
    %c0_0 = arith.constant 0 : index
    %0 = vector.load %arg1[%c0, %c0_0] : memref<8x32xbf16, #tpu.memory_space<vmem>>, vector<8x32xbf16>
    %c0_1 = arith.constant 0 : index
    %c0_2 = arith.constant 0 : index
    %1 = vector.load %arg2[%c0_1, %c0_2] : memref<32x128xbf16, #tpu.memory_space<vmem>>, vector<32x128xbf16>
    %cst = arith.constant dense<0.000000e+00> : vector<8x128xf32>
    %2 = tpu.matmul %0, %1, %cst {dimension_numbers = #tpu.dot_dimension_numbers<[1], [0], [0], [1], [0, 0, 1, 1], [], []>} : vector<8x32xbf16>, vector<32x128xbf16>, vector<8x128xf32> -> vector<8x128xf32>
    %c0_3 = arith.constant 0 : index
    %c0_4 = arith.constant 0 : index
    %3 = vector.load %arg3[%c0_3, %c0_4] : memref<8x128xf32, #tpu.memory_space<vmem>>, vector<8x128xf32>
    tpu.vector_store %arg3[%c0_3, %c0_4], %2 {strides = array<i32>} : memref<8x128xf32, #tpu.memory_space<vmem>>, vector<8x128xf32>,
    return
  }
  func.func @transform_0(%arg0: i32) -> (i32, i32) {
    %c0_i32 = arith.constant 0 : i32
    %c0_i32_0 = arith.constant 0 : i32
    return %arg0, %c0_i32 : i32, i32
  }
  func.func @transform_1(%arg0: i32) -> (i32, i32) {
    %c0_i32 = arith.constant 0 : i32
    %c0_i32_0 = arith.constant 0 : i32
    %c0_i32_1 = arith.constant 0 : i32
    return %c0_i32, %c0_i32_0 : i32, i32
  }
  func.func @transform_2(%arg0: i32) -> (i32, i32) {
    %c0_i32 = arith.constant 0 : i32
    %c0_i32_0 = arith.constant 0 : i32
    return %arg0, %c0_i32 : i32, i32
  }
}

</mosaic_0001>

<llo_original>
// kernel: tpu_custom_call.1
$region0: #{tpu_custom_call.1}
  #allocation0 [shape = 'u32[]', space=smem, size = 0x4, offset = 0x4, fixed_abs, tag = 'smem constant byte address 0x4 - core index']
  #allocation1 [shape = 'u32[144,128]{1,0:T(1,128)}', space=vmem, size = 0x12000, scoped, tag = 'internal scratch']
  %s0 = inlined_call_operand.hbm [shape: bf16[8,32], index: 0, kind: input, shape index: {}]
  %s1 = inlined_call_operand.hbm [shape: bf16[32,128], index: 1, kind: input, shape index: {}]
  %s2 = inlined_call_operand.hbm [shape: f32[8,128], index: 2, kind: output, shape index: {}]
  %s3 = sld [smem:[#allocation0]]
  $region26: #{tpu_custom_call.1} parent=0
    _
  %s5 = ssub.s32 1, %s3
  %s6 = scalar_select 0, %s5, %s3
  $region1: #{tpu_custom_call.1} parent=0
    #allocation2 [shape = 'u8[2048]{0}', space=vmem, size = 0x800, scoped, tag = 'input window, operand 0, single buffered']
    #allocation3 [shape = 's32[1]{0}', space=sflag, size = 0x4, scoped, tag = 'scoped memory for tpu_custom_call.1']
    #allocation4 [shape = 's32[1]{0}', space=sflag, size = 0x4, scoped, tag = 'scoped memory for tpu_custom_call.1']
    #allocation5 [shape = 'u8[8192]{0}', space=vmem, size = 0x2000, scoped, tag = 'input window, operand 1, single buffered']
    #allocation6 [shape = 's32[1]{0}', space=sflag, size = 0x4, scoped, tag = 'scoped memory for tpu_custom_call.1']
    #allocation7 [shape = 'u8[4096]{0}', space=vmem, size = 0x1000, scoped, tag = 'output window, operand 0, single buffered']
    %7 = vsyncpa [#allocation3], 0
    %8 = vsyncpa [#allocation6], 0
    %9 = vsyncpa [#allocation4], 0
    // Predicated region
    $region2: #{tpu_custom_call.1} parent=1 // pred_check
      _
    $region3: #{tpu_custom_call.1} parent=1 // pred_check_branch
      %11 = sbr.rel (0) target = $region5
    $region4: #{tpu_custom_call.1} parent=1 // pred_region
      %s13 = ssub.s32 64, 64
      %14 = vsyncadd [#allocation3], %s13
      %s16 = sshll.u32 [#allocation2], 4
      %s17 = int_to_ptr.vmem [resolvable:$true] %s16
      %19 = dma.hbm_to_vmem [thread:$0]  %s0, 64, %s17, [#allocation3]
    $region5: #{tpu_custom_call.1} parent=1 // pred_fallthru
      _
    // Predicated region
    $region6: #{tpu_custom_call.1} parent=1 // pred_check
      _
    $region7: #{tpu_custom_call.1} parent=1 // pred_check_branch
      %21 = sbr.rel (0) target = $region9
    $region8: #{tpu_custom_call.1} parent=1 // pred_region
      %s23 = ssub.s32 256, 256
      %24 = vsyncadd [#allocation6], %s23
      %s25 = sshll.u32 [#allocation5], 4
      %s26 = int_to_ptr.vmem [resolvable:$true] %s25
      %31 = dma.hbm_to_vmem [thread:$0]  %s1, 256, %s26, [#allocation6], 64, 64, 4
    $region9: #{tpu_custom_call.1} parent=1 // pred_fallthru
      _
    // Predicated region
    $region10: #{tpu_custom_call.1} parent=1 // pred_check
      _
    $region11: #{tpu_custom_call.1} parent=1 // pred_check_branch
      %33 = sbr.rel (0) target = $region13
    $region12: #{tpu_custom_call.1} parent=1 // pred_region
      %34 = dma.done [#allocation3], 64
    $region13: #{tpu_custom_call.1} parent=1 // pred_fallthru
      _
    // Predicated region
    $region14: #{tpu_custom_call.1} parent=1 // pred_check
      _
    $region15: #{tpu_custom_call.1} parent=1 // pred_check_branch
      %36 = sbr.rel (0) target = $region17
    $region16: #{tpu_custom_call.1} parent=1 // pred_region
      %37 = dma.done [#allocation6], 256
    $region17: #{tpu_custom_call.1} parent=1 // pred_fallthru
      _
    %v39 = vld [vmem:[#allocation2] sm:$0xf]
    %v40 = vld [vmem:[#allocation5] sm:$0xf]
    %v41 = vld [vmem:[#allocation5 + $0x4] sm:$0xf]
    %v42 = vld [vmem:[#allocation5 + $0x8] sm:$0xf]
    %v43 = vld [vmem:[#allocation5 + $0xc] sm:$0xf]
    %v48 = vunpack.c.l.b16 %v40
    %v49 = vunpack.c.l.b16 %v41
    %v50 = vunpack.c.l.b16 %v42
    %v51 = vunpack.c.l.b16 %v43
    %v52 = vpack.c.b16 %v49, %v48
    %v53 = vpack.c.b16 %v51, %v50
    %vm56 = vcmask 261120
    %v58 = vsel %vm56, %v39, 0
    %60 = vmatprep.subr.bf16.mxu0 0
    %61 = vmatpush1.bf16.msra.mxu0 %v52
    %62 = vmatprep.subr.bf16.mxu0 0
    %63 = vmatpush1.bf16.msra.mxu0 %v53
    %64 = vmatprep.subr.bf16.mxu0 0
    %65 = vmatpush1.bf16.msra.mxu0 0
    %66 = vmatprep.subr.bf16.mxu0 0
    %67 = vmatpush1.bf16.msra.mxu0 0
    %68 = vmatprep.subr.bf16.mxu0 0
    %69 = vmatpush1.bf16.msra.mxu0 0
    %70 = vmatprep.subr.bf16.mxu0 0
    %71 = vmatpush1.bf16.msra.mxu0 0
    %72 = vmatprep.subr.bf16.mxu0 0
    %73 = vmatpush1.bf16.msra.mxu0 0
    %74 = vmatprep.subr.bf16.mxu0 0
    %75 = vmatpush1.bf16.msra.mxu0 0
    %76 = vmatprep.subr.bf16.mxu0 0
    %77 = vmatpush1.bf16.msra.mxu0 0
    %78 = vmatprep.subr.bf16.mxu0 0
    %79 = vmatpush1.bf16.msra.mxu0 0
    %80 = vmatprep.subr.bf16.mxu0 0
    %81 = vmatpush1.bf16.msra.mxu0 0
    %82 = vmatprep.subr.bf16.mxu0 0
    %83 = vmatpush1.bf16.msra.mxu0 0
    %84 = vmatprep.subr.bf16.mxu0 0
    %85 = vmatpush1.bf16.msra.mxu0 0
    %86 = vmatprep.subr.bf16.mxu0 0
    %87 = vmatpush1.bf16.msra.mxu0 0
    %88 = vmatprep.subr.bf16.mxu0 0
    %89 = vmatpush1.bf16.msra.mxu0 0
    %90 = vmatprep.subr.bf16.mxu0 0
    %91 = vmatpush1.bf16.msra.mxu0 0
    %92 = vmatprep.mubr.bf16.mxu0 0
    %93 = vmatmul.mubr.bf16.gmra.mrb[0].mxu0 %v58
    %v94 = vpop.f32.mrb[0].mxu0
    %v95 = vadd.f32 0.0, %v94
    %v96 = vpop.f32.mrb[0].mxu0
    %v97 = vpop.f32.mrb[0].mxu0
    %v98 = vpop.f32.mrb[0].mxu0
    %99 = vdwg.mxu0
    %100 = vst [vmem:[#allocation7] sm:$0xff] %v95
    // Predicated region
    $region18: #{tpu_custom_call.1} parent=1 // pred_check
      _
    $region19: #{tpu_custom_call.1} parent=1 // pred_check_branch
      %102 = sbr.rel (0) target = $region21
    $region20: #{tpu_custom_call.1} parent=1 // pred_region
      %s104 = ssub.s32 128, 128
      %105 = vsyncadd [#allocation4], %s104
      %s107 = sshll.u32 [#allocation7], 4
      %s108 = int_to_ptr.vmem [resolvable:$true] %s107
      %110 = dma.vmem_to_hbm [thread:$0]  %s108, 128, %s2, [#allocation4]
    $region21: #{tpu_custom_call.1} parent=1 // pred_fallthru
      _
    // Predicated region
    $region22: #{tpu_custom_call.1} parent=1 // pred_check
      _
    $region23: #{tpu_custom_call.1} parent=1 // pred_check_branch
      %112 = sbr.rel (0) target = $region25
    $region24: #{tpu_custom_call.1} parent=1 // pred_region
      %113 = dma.done [#allocation4], 128
    $region25: #{tpu_custom_call.1} parent=1 // pred_fallthru
      _
    %114 = vsyncpa [#allocation3], 1
    %115 = vsyncpa [#allocation6], 1
    %116 = vsyncpa [#allocation4], 1

</llo_original>
